<compile_context>
chip_gen: v7x
topology: tpu7x:2x2x1
jax: 0.10.0
libtpu: 0.0.40
codegen_flags: <defaults>
</compile_context>

<pallas_src>
import functools
import math

import jax
import jax.numpy as jnp
from jax.experimental import pallas as pl
from jax.experimental.pallas import tpu as pltpu


def _arcloss_kernel(s_ref, f_ref, w_ref, out_ref,
                    emargin_scr, eplain_scr, rowsum_ref,
                    *, cos_m, sin_m, block_c, num_c_tiles):
    """Grid = (B//TB, C//TC). Axis 0: parallel over batch tiles. Axis 1:
    sequential over class tiles, accumulating the row-wise denominator."""
    j = pl.program_id(1)

    s = s_ref[0, 0]                      # global scale (f32 scalar in SMEM)

    # (TB, D) @ (D, TC) -> (TB, TC) on the MXU; weights are (in, out) so no
    # transpose / relayout is needed before the MXU push.
    z = jnp.dot(f_ref[...], w_ref[...], preferred_element_type=jnp.float32)

    cosa = jnp.clip(z / s, -1.0, 1.0)
    # Trig identity instead of cos(arccos(cosa) + m):
    sin_a = jnp.sqrt(jnp.maximum(1.0 - cosa * cosa, 0.0))
    e_plain = jnp.exp(s * cosa)                               # exp(s*cos(th))
    e_margin = jnp.exp(s * (cosa * cos_m - sin_a * sin_m))    # exp(s*cos(th+m))

    @pl.when(j == 0)
    def _init():
        rowsum_ref[...] = jnp.zeros_like(rowsum_ref)

    rowsum_ref[...] += jnp.sum(e_plain, axis=1, keepdims=True)
    emargin_scr[j] = e_margin            # per-class-tile intermediates (VMEM)
    eplain_scr[j] = e_plain

    @pl.when(j == pl.num_programs(1) - 1)
    def _finalize():
        rs = rowsum_ref[...]             # (TB, 1) full-row sum of exp(s*cosa)
        for jj in range(num_c_tiles):    # static unroll, lane-aligned stores
            num = emargin_scr[jj]
            pln = eplain_scr[jj]
            out_ref[:, jj * block_c:(jj + 1) * block_c] = num / (rs - pln + num)


def arcloss_forward(features, weights, margin, *, block_b=8, block_c=128):
    """features: (B, D); weights: (D, C) — the PyTorch (input_dim, output_dim) layout."""
    f = features.astype(jnp.float32)
    w = weights.astype(jnp.float32)
    B, D = f.shape
    D2, C = w.shape
    assert D == D2
    # TODO(synk): pad B / C (and mask padded rows/cols) when they are not tile multiples.
    assert B % block_b == 0 and C % block_c == 0
    num_b_tiles = B // block_b
    num_c_tiles = C // block_c

    # Cheap O(B*D + D*C) pre-pass hoisted out of the kernel (per perf review):
    # normalize, and compute the global scale s exactly as the module does.
    f_n = f / jnp.maximum(jnp.linalg.norm(f, axis=1, keepdims=True), 1e-12)
    w_n = w / jnp.maximum(jnp.linalg.norm(w, axis=0, keepdims=True), 1e-12)
    s = jnp.sqrt(jnp.sum(f_n * f_n)) * jnp.sqrt(jnp.sum(w_n * w_n))
    s = s.reshape(1, 1).astype(jnp.float32)

    kernel = functools.partial(
        _arcloss_kernel,
        cos_m=float(math.cos(margin)),
        sin_m=float(math.sin(margin)),
        block_c=block_c,
        num_c_tiles=num_c_tiles,
    )

    cost = pl.CostEstimate(
        flops=2 * B * C * D,
        transcendentals=2 * B * C,
        bytes_accessed=4 * (B * D + D * C + B * C + 1),
    )

    return pl.pallas_call(
        kernel,
        out_shape=jax.ShapeDtypeStruct((B, C), jnp.float32),
        grid_spec=pltpu.PrefetchScalarGridSpec(
            num_scalar_prefetch=0,
            grid=(num_b_tiles, num_c_tiles),
            in_specs=[
                pl.BlockSpec(memory_space=pltpu.SMEM),            # s: (1,1) scalar
                pl.BlockSpec((block_b, D), lambda i, j: (i, 0)),  # feature tile (resident per i)
                pl.BlockSpec((D, block_c), lambda i, j: (0, j)),  # weight tile (streamed over C)
            ],
            out_specs=pl.BlockSpec((block_b, C), lambda i, j: (i, 0)),  # row block resident
            scratch_shapes=[
                pltpu.VMEM((num_c_tiles, block_b, block_c), jnp.float32),  # exp(s*cos(th+m))
                pltpu.VMEM((num_c_tiles, block_b, block_c), jnp.float32),  # exp(s*cos(th))
                pltpu.VMEM((block_b, 1), jnp.float32),                     # running row sum
            ],
        ),
        compiler_params=pltpu.CompilerParams(
            dimension_semantics=("parallel", "arbitrary"),
            vmem_limit_bytes=48 * 1024 * 1024,
        ),
        cost_estimate=cost,
    )(s, f_n, w_n)


def reference_arcloss(features, weights, margin):
    """Pure-JAX mirror of the PyTorch forward (acos/cos formulation)."""
    f = features.astype(jnp.float32)
    w = weights.astype(jnp.float32)
    f_n = f / jnp.maximum(jnp.linalg.norm(f, axis=1, keepdims=True), 1e-12)
    w_n = w / jnp.maximum(jnp.linalg.norm(w, axis=0, keepdims=True), 1e-12)
    s = jnp.sqrt(jnp.sum(f_n * f_n)) * jnp.sqrt(jnp.sum(w_n * w_n))
    cosa = (f_n @ w_n) / s
    angle = jnp.arccos(cosa)
    e_plain = jnp.exp(s * cosa)
    e_margin = jnp.exp(s * jnp.cos(angle + margin))
    denom = jnp.sum(e_plain, axis=1, keepdims=True) - e_plain + e_margin
    return e_margin / denom


if __name__ == "__main__":
    B, IN_FEATURES, OUT_FEATURES = 16, 64, 256
    MARGIN = 0.5

    key = jax.random.PRNGKey(0)
    k_feat, k_w = jax.random.split(key)

    features = jax.random.normal(k_feat, (B, IN_FEATURES), dtype=jnp.float32)
    # kaiming_uniform_-style init for the (input_dim, output_dim) parameter.
    bound = math.sqrt(6.0 / IN_FEATURES)
    weights = jax.random.uniform(k_w, (IN_FEATURES, OUT_FEATURES),
                                 dtype=jnp.float32, minval=-bound, maxval=bound)

    out = arcloss_forward(features, weights, MARGIN, block_b=8, block_c=128)
    out = jax.block_until_ready(out)

    ref = reference_arcloss(features, weights, MARGIN)
    assert out.shape == (B, OUT_FEATURES)
    assert bool(jnp.isfinite(out).all())
    rel_err = float(jnp.max(jnp.abs(out - ref) / (jnp.abs(ref) + 1e-30)))
    assert rel_err < 2e-2, rel_err

    print("KERNEL_OK")
</pallas_src>

<mosaic_0001>
module attributes {stable_mosaic.version = 11 : i64} {
  func.func @_arcloss_kernel(%arg0: i32, %arg1: i32, %arg2: memref<1x1xf32, #tpu.memory_space<smem>>, %arg3: memref<8x64xf32, #tpu.memory_space<vmem>>, %arg4: memref<64x128xf32, #tpu.memory_space<vmem>>, %arg5: memref<8x256xf32, #tpu.memory_space<vmem>>, %arg6: memref<2x8x128xf32, #tpu.memory_space<vmem>>, %arg7: memref<2x8x128xf32, #tpu.memory_space<vmem>>, %arg8: memref<8x1xf32, #tpu.memory_space<vmem>>) attributes {dimension_semantics = [#tpu.dimension_semantics<parallel>, #tpu.dimension_semantics<arbitrary>], iteration_bounds = array<i64: 2, 2>, scalar_prefetch = 0 : i64, scratch_operands = 3 : i64, tpu.core_type = #tpu.core_type<tc>, window_params = [{transform_indices = @transform_0, window_bounds = array<i64: 1, 1>}, {transform_indices = @transform_1, window_bounds = array<i64: 8, 64>}, {transform_indices = @transform_2, window_bounds = array<i64: 64, 128>}, {transform_indices = @transform_3, window_bounds = array<i64: 8, 256>}]} {
    %c0 = arith.constant 0 : index
    %c0_0 = arith.constant 0 : index
    %0 = memref.load %arg2[%c0, %c0_0] : memref<1x1xf32, #tpu.memory_space<smem>>
    %c0_1 = arith.constant 0 : index
    %c0_2 = arith.constant 0 : index
    %1 = vector.load %arg3[%c0_1, %c0_2] : memref<8x64xf32, #tpu.memory_space<vmem>>, vector<8x64xf32>
    %c0_3 = arith.constant 0 : index
    %c0_4 = arith.constant 0 : index
    %2 = vector.load %arg4[%c0_3, %c0_4] : memref<64x128xf32, #tpu.memory_space<vmem>>, vector<64x128xf32>
    %cst = arith.constant dense<0.000000e+00> : vector<8x128xf32>
    %3 = tpu.matmul %1, %2, %cst {dimension_numbers = #tpu.dot_dimension_numbers<[1], [0], [0], [1], [0, 0, 1, 1], [], []>} : vector<8x64xf32>, vector<64x128xf32>, vector<8x128xf32> -> vector<8x128xf32>
    %4 = vector.broadcast %0 : f32 to vector<8x128xf32>
    %5 = arith.divf %3, %4 : vector<8x128xf32>
    %cst_5 = arith.constant -1.000000e+00 : f32
    %cst_6 = arith.constant 1.000000e+00 : f32
    %6 = vector.broadcast %cst_5 : f32 to vector<8x128xf32>
    %7 = arith.maximumf %6, %5 : vector<8x128xf32>
    %8 = vector.broadcast %cst_6 : f32 to vector<8x128xf32>
    %9 = arith.minimumf %8, %7 : vector<8x128xf32>
    %10 = arith.mulf %9, %9 : vector<8x128xf32>
    %cst_7 = arith.constant 1.000000e+00 : f32
    %11 = vector.broadcast %cst_7 : f32 to vector<8x128xf32>
    %12 = arith.subf %11, %10 : vector<8x128xf32>
    %cst_8 = arith.constant 0.000000e+00 : f32
    %13 = vector.broadcast %cst_8 : f32 to vector<8x128xf32>
    %14 = arith.maximumf %12, %13 : vector<8x128xf32>
    %15 = math.sqrt %14 : vector<8x128xf32>
    %16 = vector.broadcast %0 : f32 to vector<8x128xf32>
    %17 = arith.mulf %16, %9 : vector<8x128xf32>
    %18 = math.exp %17 : vector<8x128xf32>
    %cst_9 = arith.constant 0.87758255 : f32
    %19 = vector.broadcast %cst_9 : f32 to vector<8x128xf32>
    %20 = arith.mulf %9, %19 : vector<8x128xf32>
    %cst_10 = arith.constant 0.47942555 : f32
    %21 = vector.broadcast %cst_10 : f32 to vector<8x128xf32>
    %22 = arith.mulf %15, %21 : vector<8x128xf32>
    %23 = arith.subf %20, %22 : vector<8x128xf32>
    %24 = vector.broadcast %0 : f32 to vector<8x128xf32>
    %25 = arith.mulf %24, %23 : vector<8x128xf32>
    %26 = math.exp %25 : vector<8x128xf32>
    %c0_i32 = arith.constant 0 : i32
    %27 = arith.cmpi eq, %arg1, %c0_i32 : i32
    %28 = arith.extui %27 : i1 to i32
    %c0_i32_11 = arith.constant 0 : i32
    %29 = arith.cmpi ne, %28, %c0_i32_11 : i32
    scf.if %29 {
      %cst_22 = arith.constant 0.000000e+00 : f32
      %46 = vector.broadcast %cst_22 : f32 to vector<8x1xf32>
      %c0_23 = arith.constant 0 : index
      %c0_24 = arith.constant 0 : index
      %47 = vector.load %arg8[%c0_23, %c0_24] : memref<8x1xf32, #tpu.memory_space<vmem>>, vector<8x1xf32>
      tpu.vector_store %arg8[%c0_23, %c0_24], %46 {strides = array<i32>} : memref<8x1xf32, #tpu.memory_space<vmem>>, vector<8x1xf32>,
    } else {
    }
    %c0_12 = arith.constant 0 : index
    %c0_13 = arith.constant 0 : index
    %30 = vector.load %arg8[%c0_12, %c0_13] : memref<8x1xf32, #tpu.memory_space<vmem>>, vector<8x1xf32>
    %cst_14 = arith.constant dense<0.000000e+00> : vector<8xf32>
    %31 = vector.multi_reduction <add>, %18, %cst_14 [1] : vector<8x128xf32> to vector<8xf32>
    %32 = vector.shape_cast %31 : vector<8xf32> to vector<8x1xf32>
    %33 = arith.addf %30, %32 : vector<8x1xf32>
    %c0_15 = arith.constant 0 : index
    %c0_16 = arith.constant 0 : index
    %34 = vector.load %arg8[%c0_15, %c0_16] : memref<8x1xf32, #tpu.memory_space<vmem>>, vector<8x1xf32>
    tpu.vector_store %arg8[%c0_15, %c0_16], %33 {strides = array<i32>} : memref<8x1xf32, #tpu.memory_space<vmem>>, vector<8x1xf32>,
    %35 = arith.index_cast %arg1 : i32 to index
    %c0_17 = arith.constant 0 : index
    %c0_18 = arith.constant 0 : index
    %36 = vector.load %arg6[%35, %c0_17, %c0_18] : memref<2x8x128xf32, #tpu.memory_space<vmem>>, vector<1x8x128xf32>
    %37 = vector.shape_cast %36 : vector<1x8x128xf32> to vector<8x128xf32>
    %38 = vector.shape_cast %26 : vector<8x128xf32> to vector<1x8x128xf32>
    tpu.vector_store %arg6[%35, %c0_17, %c0_18], %38 {strides = array<i32>} : memref<2x8x128xf32, #tpu.memory_space<vmem>>, vector<1x8x128xf32>,
    %39 = arith.index_cast %arg1 : i32 to index
    %c0_19 = arith.constant 0 : index
    %c0_20 = arith.constant 0 : index
    %40 = vector.load %arg7[%39, %c0_19, %c0_20] : memref<2x8x128xf32, #tpu.memory_space<vmem>>, vector<1x8x128xf32>
    %41 = vector.shape_cast %40 : vector<1x8x128xf32> to vector<8x128xf32>
    %42 = vector.shape_cast %18 : vector<8x128xf32> to vector<1x8x128xf32>
    tpu.vector_store %arg7[%39, %c0_19, %c0_20], %42 {strides = array<i32>} : memref<2x8x128xf32, #tpu.memory_space<vmem>>, vector<1x8x128xf32>,
    %c1_i32 = arith.constant 1 : i32
    %43 = arith.cmpi eq, %arg1, %c1_i32 : i32
    %44 = arith.extui %43 : i1 to i32
    %c0_i32_21 = arith.constant 0 : i32
    %45 = arith.cmpi ne, %44, %c0_i32_21 : i32
    scf.if %45 {
      %c0_22 = arith.constant 0 : index
      %c0_23 = arith.constant 0 : index
      %46 = vector.load %arg8[%c0_22, %c0_23] : memref<8x1xf32, #tpu.memory_space<vmem>>, vector<8x1xf32>
      %c0_24 = arith.constant 0 : index
      %c0_25 = arith.constant 0 : index
      %c0_26 = arith.constant 0 : index
      %47 = vector.load %arg6[%c0_24, %c0_25, %c0_26] : memref<2x8x128xf32, #tpu.memory_space<vmem>>, vector<1x8x128xf32>
      %48 = vector.shape_cast %47 : vector<1x8x128xf32> to vector<8x128xf32>
      %c0_27 = arith.constant 0 : index
      %c0_28 = arith.constant 0 : index
      %c0_29 = arith.constant 0 : index
      %49 = vector.load %arg7[%c0_27, %c0_28, %c0_29] : memref<2x8x128xf32, #tpu.memory_space<vmem>>, vector<1x8x128xf32>
      %50 = vector.shape_cast %49 : vector<1x8x128xf32> to vector<8x128xf32>
      %51 = vector.broadcast %46 : vector<8x1xf32> to vector<8x128xf32>
      %52 = arith.subf %51, %50 : vector<8x128xf32>
      %53 = arith.addf %52, %48 : vector<8x128xf32>
      %54 = arith.divf %48, %53 : vector<8x128xf32>
      %c0_30 = arith.constant 0 : index
      %c0_31 = arith.constant 0 : index
      %55 = vector.load %arg5[%c0_30, %c0_31] : memref<8x256xf32, #tpu.memory_space<vmem>>, vector<8x128xf32>
      tpu.vector_store %arg5[%c0_30, %c0_31], %54 {strides = array<i32>} : memref<8x256xf32, #tpu.memory_space<vmem>>, vector<8x128xf32>,
      %c1 = arith.constant 1 : index
      %c0_32 = arith.constant 0 : index
      %c0_33 = arith.constant 0 : index
      %56 = vector.load %arg6[%c1, %c0_32, %c0_33] : memref<2x8x128xf32, #tpu.memory_space<vmem>>, vector<1x8x128xf32>
      %57 = vector.shape_cast %56 : vector<1x8x128xf32> to vector<8x128xf32>
      %c1_34 = arith.constant 1 : index
      %c0_35 = arith.constant 0 : index
      %c0_36 = arith.constant 0 : index
      %58 = vector.load %arg7[%c1_34, %c0_35, %c0_36] : memref<2x8x128xf32, #tpu.memory_space<vmem>>, vector<1x8x128xf32>
      %59 = vector.shape_cast %58 : vector<1x8x128xf32> to vector<8x128xf32>
      %60 = vector.broadcast %46 : vector<8x1xf32> to vector<8x128xf32>
      %61 = arith.subf %60, %59 : vector<8x128xf32>
      %62 = arith.addf %61, %57 : vector<8x128xf32>
      %63 = arith.divf %57, %62 : vector<8x128xf32>
      %c0_37 = arith.constant 0 : index
      %c128 = arith.constant 128 : index
      %64 = vector.load %arg5[%c0_37, %c128] : memref<8x256xf32, #tpu.memory_space<vmem>>, vector<8x128xf32>
      tpu.vector_store %arg5[%c0_37, %c128], %63 {strides = array<i32>} : memref<8x256xf32, #tpu.memory_space<vmem>>, vector<8x128xf32>,
    } else {
    }
    return
  }
  func.func @transform_0(%arg0: i32, %arg1: i32) -> (i32, i32) {
    %c0_i32 = arith.constant 0 : i32
    %c0_i32_0 = arith.constant 0 : i32
    %c0_i32_1 = arith.constant 0 : i32
    return %c0_i32, %c0_i32_0 : i32, i32
  }
  func.func @transform_1(%arg0: i32, %arg1: i32) -> (i32, i32) {
    %c0_i32 = arith.constant 0 : i32
    %c0_i32_0 = arith.constant 0 : i32
    return %arg0, %c0_i32 : i32, i32
  }
  func.func @transform_2(%arg0: i32, %arg1: i32) -> (i32, i32) {
    %c0_i32 = arith.constant 0 : i32
    %c0_i32_0 = arith.constant 0 : i32
    return %c0_i32, %arg1 : i32, i32
  }
  func.func @transform_3(%arg0: i32, %arg1: i32) -> (i32, i32) {
    %c0_i32 = arith.constant 0 : i32
    %c0_i32_0 = arith.constant 0 : i32
    return %arg0, %c0_i32 : i32, i32
  }
}

</mosaic_0001>

<llo_original>
// kernel: tpu_custom_call.1
$region0: #{tpu_custom_call.1}
  #allocation0 [shape = 'u32[]', space=smem, size = 0x4, offset = 0x4, fixed_abs, tag = 'smem constant byte address 0x4 - core index']
  #allocation1 [shape = 'u32[144,128]{1,0:T(1,128)}', space=vmem, size = 0x12000, scoped, tag = 'internal scratch']
  #allocation2 [shape = 'f32[2,8,128]{2,1,0:T(8,128)}', space=vmem, size = 0x2000, scoped, tag = 'scratch operand']
  #allocation3 [shape = 'f32[2,8,128]{2,1,0:T(8,128)}', space=vmem, size = 0x2000, scoped, tag = 'scratch operand']
  #allocation4 [shape = 'f32[8,1]{1,0:T(8,128)}', space=vmem, size = 0x1000, scoped, tag = 'scratch operand']
  #allocation5 [shape = 'f32[1,1]{1,0:T(1,128)S(6)}', space=smem, size = 0x200, scoped, tag = 'scoped memory for tpu_custom_call.1']
  %s0 = inlined_call_operand.<no memory space> [shape: f32[1,1], index: 0, kind: input, shape index: {}]
  %s1 = inlined_call_operand.hbm [shape: f32[16,64], index: 1, kind: input, shape index: {}]
  %s2 = inlined_call_operand.hbm [shape: f32[64,256], index: 2, kind: input, shape index: {}]
  %s3 = inlined_call_operand.hbm [shape: f32[16,256], index: 3, kind: output, shape index: {}]
  %s4 = sld [smem:[#allocation0]]
  $region61: #{tpu_custom_call.1} parent=0
    _
  %s6 = ssub.s32 1, %s4
  %s7 = scalar_select 0, %s6, %s4
  %8 = sst [smem:[#allocation5]] %s0
  $region1: #{tpu_custom_call.1} parent=0
    #allocation6 [shape = 'u8[8192]{0}', space=vmem, size = 0x2000, scoped, tag = 'input window, operand 1']
    #allocation7 [shape = 's32[2]{0}', space=sflag, size = 0x8, scoped, tag = 'scoped memory for tpu_custom_call.1']
    #allocation8 [shape = 's32[2]{0}', space=sflag, size = 0x8, scoped, tag = 'scoped memory for tpu_custom_call.1']
    #allocation9 [shape = 'u8[65536]{0}', space=vmem, size = 0x10000, scoped, tag = 'input window, operand 2']
    #allocation10 [shape = 's32[2]{0}', space=sflag, size = 0x8, scoped, tag = 'scoped memory for tpu_custom_call.1']
    #allocation11 [shape = 'u8[16384]{0}', space=vmem, size = 0x4000, scoped, tag = 'output window, operand 0']
    %9 = vsyncpa [#allocation7], 0
    %s10 = scalar_lea.sflag [#allocation7], 1
    %11 = vsyncpa %s10, 0
    %12 = vsyncpa [#allocation10], 0
    %s13 = scalar_lea.sflag [#allocation10], 1
    %14 = vsyncpa %s13, 0
    %15 = vsyncpa [#allocation8], 0
    %s16 = scalar_lea.sflag [#allocation8], 1
    %17 = vsyncpa %s16, 0
    loop: start=0, step=1, limit=6
    $region2: #{tpu_custom_call.1} parent=1 // loop_pre_header
      _
    $region3: #{tpu_custom_call.1} parent=1 // loop_header
      %s19 = sphi 0, %s23
      %p20 = scmp.ge.s32.totalorder %s19, 6
      %s26 = sphi 0, %s38
      %s27 = sphi 0, %s34
      %s28 = sphi 0, %s26
      %s29 = sphi 0, %s27
      %s30 = sphi 0, %s28
      %s31 = sphi 0, %s29
      %s39 = sphi 0, %s39
      %s41 = sphi 0, %s39
      %s42 = sphi 0, %s41
      %s56 = sphi 0, %s42
      %s62 = sphi 0, %s64
      %s65 = sphi 0, %s62
      %s66 = sphi 0, %s65
      %s82 = sphi 0, %s66
      %s88 = sphi 0, %s90
      %s91 = sphi 0, %s88
      %s92 = sphi 0, %s91
      %s108 = sphi 0, %s92
      %s114 = sphi 0, %s116
      %s117 = sphi 0, %s114
      %s118 = sphi 0, %s117
      %s134 = sphi 0, %s118
    $region4: #{tpu_custom_call.1} parent=1 // loop_header_branch
      %22 = sbr.rel (%p20) target = $region8
    $region5: #{tpu_custom_call.1} parent=1 // loop_body
      %s24 = ssub.s32 %s19, 1
      %s25 = ssub.s32 %s19, 2
      %s32 = sadd.s32 1, %s27
      %p33 = scmp.ge.s32.totalorder %s32, 2
      %s34 = scalar_select %p33, 0, %s32
      %s35 = sadd.s32 1, %s26
      %s36 = scalar_select %p33, %s35, %s26
      %p37 = scmp.ge.s32.totalorder %s36, 2
      %s38 = scalar_select %p37, 0, %s36
      %s40 = sadd.s32 %s39, 1
      %p43 = scmp.eq.s32.totalorder %s19, 3
      %p44 = scmp.ne.s32.totalorder %s39, %s41
      %p45 = scmp.eq.s32.totalorder %s19, 0
      %p46 = por %p44, %p45
      %p47 = scmp.ne.s32.totalorder %s39, %s41
      %p48 = scmp.eq.s32.totalorder %s24, 3
      %p49 = por %p47, %p48
      %p50 = scmp.ne.s32.totalorder %s41, %s42
      %p51 = scmp.eq.s32.totalorder %s24, 0
      %p52 = por %p50, %p51
      %p53 = scmp.ne.s32.totalorder %s41, %s42
      %p54 = scmp.eq.s32.totalorder %s25, 3
      %p55 = por %p53, %p54
      %p57 = scmp.ne.s32.totalorder %s42, %s56
      %p58 = scmp.eq.s32.totalorder %s25, 0
      %p59 = por %p57, %p58
      %s60 = ssub.s32 %s26, %s38
      %p61 = scmp.eq.s32.totalorder %s60, 0
      %s63 = sadd.s32 %s62, 1
      %s64 = scalar_select %p61, %s62, %s63
      %p67 = pneg %p61
      %p68 = scmp.eq.s32.totalorder %s19, 3
      %p69 = por %p67, %p68
      %p70 = scmp.ne.s32.totalorder %s62, %s65
      %p71 = scmp.eq.s32.totalorder %s19, 0
      %p72 = por %p70, %p71
      %p73 = scmp.ne.s32.totalorder %s62, %s65
      %p74 = scmp.eq.s32.totalorder %s24, 3
      %p75 = por %p73, %p74
      %p76 = scmp.ne.s32.totalorder %s65, %s66
      %p77 = scmp.eq.s32.totalorder %s24, 0
      %p78 = por %p76, %p77
      %p79 = scmp.ne.s32.totalorder %s65, %s66
      %p80 = scmp.eq.s32.totalorder %s25, 3
      %p81 = por %p79, %p80
      %p83 = scmp.ne.s32.totalorder %s66, %s82
      %p84 = scmp.eq.s32.totalorder %s25, 0
      %p85 = por %p83, %p84
      %s86 = ssub.s32 %s27, %s34
      %p87 = scmp.eq.s32.totalorder %s86, 0
      %s89 = sadd.s32 %s88, 1
      %s90 = scalar_select %p87, %s88, %s89
      %p93 = pneg %p87
      %p94 = scmp.eq.s32.totalorder %s19, 3
      %p95 = por %p93, %p94
      %p96 = scmp.ne.s32.totalorder %s88, %s91
      %p97 = scmp.eq.s32.totalorder %s19, 0
      %p98 = por %p96, %p97
      %p99 = scmp.ne.s32.totalorder %s88, %s91
      %p100 = scmp.eq.s32.totalorder %s24, 3
      %p101 = por %p99, %p100
      %p102 = scmp.ne.s32.totalorder %s91, %s92
      %p103 = scmp.eq.s32.totalorder %s24, 0
      %p104 = por %p102, %p103
      %p105 = scmp.ne.s32.totalorder %s91, %s92
      %p106 = scmp.eq.s32.totalorder %s25, 3
      %p107 = por %p105, %p106
      %p109 = scmp.ne.s32.totalorder %s92, %s108
      %p110 = scmp.eq.s32.totalorder %s25, 0
      %p111 = por %p109, %p110
      %s112 = ssub.s32 %s26, %s38
      %p113 = scmp.eq.s32.totalorder %s112, 0
      %s115 = sadd.s32 %s114, 1
      %s116 = scalar_select %p113, %s114, %s115
      %p119 = pneg %p113
      %p120 = scmp.eq.s32.totalorder %s19, 3
      %p121 = por %p119, %p120
      %p122 = scmp.ne.s32.totalorder %s114, %s117
      %p123 = scmp.eq.s32.totalorder %s19, 0
      %p124 = por %p122, %p123
      %p125 = scmp.ne.s32.totalorder %s114, %s117
      %p126 = scmp.eq.s32.totalorder %s24, 3
      %p127 = por %p125, %p126
      %p128 = scmp.ne.s32.totalorder %s117, %s118
      %p129 = scmp.eq.s32.totalorder %s24, 0
      %p130 = por %p128, %p129
      %p131 = scmp.ne.s32.totalorder %s117, %s118
      %p132 = scmp.eq.s32.totalorder %s25, 3
      %p133 = por %p131, %p132
      %p135 = scmp.ne.s32.totalorder %s118, %s134
      %p136 = scmp.eq.s32.totalorder %s25, 0
      %p137 = por %p135, %p136
      %p138 = scmp.le.s32.totalorder 1, %s19
      %p139 = scmp.lt.s32.totalorder %s19, 5
      %p140 = pnand %p138, %p139
      %p141 = pneg %p140
      // Predicated region
      $region9: #{tpu_custom_call.1} parent=5 // pred_check
        _
      $region10: #{tpu_custom_call.1} parent=5 // pred_check_branch
        %143 = sbr.rel (%p140) target = $region12
      $region11: #{tpu_custom_call.1} parent=5 // pred_region
        %s144 = ssub.s32 %s19, 1
        // Predicated region
        $region13: #{tpu_custom_call.1} parent=11 // pred_check
          %p145 = pneg %p52
        $region14: #{tpu_custom_call.1} parent=11 // pred_check_branch
          %147 = sbr.rel (%p145) target = $region16
        $region15: #{tpu_custom_call.1} parent=11 // pred_region
          _
        $region16: #{tpu_custom_call.1} parent=11 // pred_fallthru
          _
      $region12: #{tpu_custom_call.1} parent=5 // pred_fallthru
        _
      %p148 = scmp.lt.s32.totalorder %s19, 4
      // Predicated region
      $region17: #{tpu_custom_call.1} parent=5 // pred_check
        %p149 = pneg %p148
      $region18: #{tpu_custom_call.1} parent=5 // pred_check_branch
        %151 = sbr.rel (%p149) target = $region20
      $region19: #{tpu_custom_call.1} parent=5 // pred_region
        // Predicated region
        $region21: #{tpu_custom_call.1} parent=19 // pred_check
          %p152 = pneg %p72
        $region22: #{tpu_custom_call.1} parent=19 // pred_check_branch
          %154 = sbr.rel (%p152) target = $region24
        $region23: #{tpu_custom_call.1} parent=19 // pred_region
          %s155 = sand.u32 %s62, 1
          %s156 = scalar_lea.sflag [#allocation7], %s155
          %s157 = sand.u32 %s62, 1
          %s158 = smul.addr %s157, 8
          %s159 = scalar_lea.vmem [#allocation6], %s158
          %s161 = ssub.s32 128, 128
          %162 = vsyncadd %s156, %s161
          %s163 = smul.addr %s26, 128
          %s164 = scalar_lea.hbm %s1, %s163
          %s166 = sshll.u32 %s159, 4
          %s167 = int_to_ptr.vmem [resolvable:$true] %s166
          %169 = dma.hbm_to_vmem [thread:$0]  %s164, 128, %s167, %s156
        $region24: #{tpu_custom_call.1} parent=19 // pred_fallthru
          _
        // Predicated region
        $region25: #{tpu_custom_call.1} parent=19 // pred_check
          %p170 = pneg %p98
        $region26: #{tpu_custom_call.1} parent=19 // pred_check_branch
          %172 = sbr.rel (%p170) target = $region28
        $region27: #{tpu_custom_call.1} parent=19 // pred_region
          %s173 = sand.u32 %s88, 1
          %s174 = scalar_lea.sflag [#allocation10], %s173
          %s175 = sand.u32 %s88, 1
          %s176 = smul.addr %s175, 64
          %s177 = scalar_lea.vmem [#allocation9], %s176
          %s179 = ssub.s32 1024, 1024
          %180 = vsyncadd %s174, %s179
          %s181 = smul.addr %s27, 128
          %s182 = scalar_lea.hbm %s2, %s181
          %s183 = sshll.u32 %s177, 4
          %s184 = int_to_ptr.vmem [resolvable:$true] %s183
          %189 = dma.hbm_to_vmem [thread:$0]  %s182, 1024, %s184, %s174, 256, 128, 8
        $region28: #{tpu_custom_call.1} parent=19 // pred_fallthru
          _
      $region20: #{tpu_custom_call.1} parent=5 // pred_fallthru
        _
      %p190 = scmp.le.s32.totalorder 1, %s19
      %p191 = scmp.lt.s32.totalorder %s19, 5
      %p192 = pnand %p190, %p191
      %p193 = pneg %p192
      // Predicated region
      $region29: #{tpu_custom_call.1} parent=5 // pred_check
        _
      $region30: #{tpu_custom_call.1} parent=5 // pred_check_branch
        %195 = sbr.rel (%p192) target = $region32
      $region31: #{tpu_custom_call.1} parent=5 // pred_region
        %s196 = ssub.s32 %s19, 1
        %s197 = sand.u32 %s65, 1
        %s198 = scalar_lea.sflag [#allocation7], %s197
        %s199 = sand.u32 %s65, 1
        %s200 = smul.addr %s199, 8
        %s201 = scalar_lea.vmem [#allocation6], %s200
        // Predicated region
        $region33: #{tpu_custom_call.1} parent=31 // pred_check
          %p202 = pneg %p78
        $region34: #{tpu_custom_call.1} parent=31 // pred_check_branch
          %204 = sbr.rel (%p202) target = $region36
        $region35: #{tpu_custom_call.1} parent=31 // pred_region
          %205 = dma.done %s198, 128
        $region36: #{tpu_custom_call.1} parent=31 // pred_fallthru
          _
        %s206 = sand.u32 %s91, 1
        %s207 = scalar_lea.sflag [#allocation10], %s206
        %s208 = sand.u32 %s91, 1
        %s209 = smul.addr %s208, 64
        %s210 = scalar_lea.vmem [#allocation9], %s209
        // Predicated region
        $region37: #{tpu_custom_call.1} parent=31 // pred_check
          %p211 = pneg %p104
        $region38: #{tpu_custom_call.1} parent=31 // pred_check_branch
          %213 = sbr.rel (%p211) target = $region40
        $region39: #{tpu_custom_call.1} parent=31 // pred_region
          %214 = dma.done %s207, 1024
        $region40: #{tpu_custom_call.1} parent=31 // pred_fallthru
          _
        %p215 = pneg %p52
        %p216 = pneg %p49
        %s217 = sand.u32 %s65, 1
        %s218 = scalar_lea.sflag [#allocation7], %s217
        %s219 = sand.u32 %s65, 1
        %s220 = smul.addr %s219, 8
        %s221 = scalar_lea.vmem [#allocation6], %s220
        %p222 = pneg %p78
        %p223 = pneg %p75
        %s224 = sand.u32 %s91, 1
        %s225 = scalar_lea.sflag [#allocation10], %s224
        %s226 = sand.u32 %s91, 1
        %s227 = smul.addr %s226, 64
        %s228 = scalar_lea.vmem [#allocation9], %s227
        %p229 = pneg %p104
        %p230 = pneg %p101
        %p231 = pneg %p130
        %p232 = pneg %p127
        %s233 = sand.u32 %s117, 1
        %s234 = scalar_lea.sflag [#allocation8], %s233
        %s235 = sand.u32 %s117, 1
        %s236 = smul.addr %s235, 16
        %s237 = scalar_lea.vmem [#allocation11], %s236
        %s238 = sld [smem:[#allocation5]]
        %v239 = vld [vmem:[%s201] sm:$0xff]
        %v240 = vld [vmem:[%s210] sm:$0xff]
        %v241 = vld [vmem:[%s210 + $0x8] sm:$0xff]
        %v242 = vld [vmem:[%s210 + $0x10] sm:$0xff]
        %v243 = vld [vmem:[%s210 + $0x18] sm:$0xff]
        %v244 = vld [vmem:[%s210 + $0x20] sm:$0xff]
        %v245 = vld [vmem:[%s210 + $0x28] sm:$0xff]
        %v246 = vld [vmem:[%s210 + $0x30] sm:$0xff]
        %v247 = vld [vmem:[%s210 + $0x38] sm:$0xff]
        %vm248 = vcmask 523264
        %v250 = vsel %vm248, %v239, 0
        %252 = vmatprep.subr.mxu0 0.0
        %253 = vmatpush1.msra.mxu0 %v240
        %254 = vmatprep.subr.mxu0 0.0
        %255 = vmatpush1.msra.mxu0 %v241
        %256 = vmatprep.subr.mxu0 0.0
        %257 = vmatpush1.msra.mxu0 %v242
        %258 = vmatprep.subr.mxu0 0.0
        %259 = vmatpush1.msra.mxu0 %v243
        %260 = vmatprep.subr.mxu0 0.0
        %261 = vmatpush1.msra.mxu0 %v244
        %262 = vmatprep.subr.mxu0 0.0
        %263 = vmatpush1.msra.mxu0 %v245
        %264 = vmatprep.subr.mxu0 0.0
        %265 = vmatpush1.msra.mxu0 %v246
        %266 = vmatprep.subr.mxu0 0.0
        %267 = vmatpush1.msra.mxu0 %v247
        %268 = vmatprep.subr.mxu0 0.0
        %269 = vmatpush1.msra.mxu0 0.0
        %270 = vmatprep.subr.mxu0 0.0
        %271 = vmatpush1.msra.mxu0 0.0
        %272 = vmatprep.subr.mxu0 0.0
        %273 = vmatpush1.msra.mxu0 0.0
        %274 = vmatprep.subr.mxu0 0.0
        %275 = vmatpush1.msra.mxu0 0.0
        %276 = vmatprep.subr.mxu0 0.0
        %277 = vmatpush1.msra.mxu0 0.0
        %278 = vmatprep.subr.mxu0 0.0
        %279 = vmatpush1.msra.mxu0 0.0
        %280 = vmatprep.subr.mxu0 0.0
        %281 = vmatpush1.msra.mxu0 0.0
        %282 = vmatprep.subr.mxu0 0.0
        %283 = vmatpush1.msra.mxu0 0.0
        %284 = vmatprep.subr.mxu0 0.0
        %285 = vmatpush1.msra.mxu0 0.0
        %286 = vmatprep.subr.mxu0 0.0
        %287 = vmatpush1.msra.mxu0 0.0
        %288 = vmatprep.subr.mxu0 0.0
        %289 = vmatpush1.msra.mxu0 0.0
        %290 = vmatprep.subr.mxu0 0.0
        %291 = vmatpush1.msra.mxu0 0.0
        %292 = vmatprep.subr.mxu0 0.0
        %293 = vmatpush1.msra.mxu0 0.0
        %294 = vmatprep.subr.mxu0 0.0
        %295 = vmatpush1.msra.mxu0 0.0
        %296 = vmatprep.subr.mxu0 0.0
        %297 = vmatpush1.msra.mxu0 0.0
        %298 = vmatprep.subr.mxu0 0.0
        %299 = vmatpush1.msra.mxu0 0.0
        %300 = vmatprep.subr.mxu0 0.0
        %301 = vmatpush1.msra.mxu0 0.0
        %302 = vmatprep.subr.mxu0 0.0
        %303 = vmatpush1.msra.mxu0 0.0
        %304 = vmatprep.subr.mxu0 0.0
        %305 = vmatpush1.msra.mxu0 0.0
        %306 = vmatprep.subr.mxu0 0.0
        %307 = vmatpush1.msra.mxu0 0.0
        %308 = vmatprep.subr.mxu0 0.0
        %309 = vmatpush1.msra.mxu0 0.0
        %310 = vmatprep.subr.mxu0 0.0
        %311 = vmatpush1.msra.mxu0 0.0
        %312 = vmatprep.subr.mxu0 0.0
        %313 = vmatpush1.msra.mxu0 0.0
        %314 = vmatprep.subr.mxu0 0.0
        %315 = vmatpush1.msra.mxu0 0.0
        %316 = vmatprep.mubr.f32.mxu0 0.0
        %317 = vmatmul.mubr.f32.gmra.mrb[0].mxu0 %v250
        %v318 = vpop.f32.mrb[0].mxu0
        %v319 = vadd.f32 0.0, %v318
        %v320 = vpop.f32.mrb[0].mxu0
        %321 = vdwg.mxu0
        %v322 = vstv %s238
        %v323 = vrcp.pop %v322
        %v324 = vmul.f32 %v319, %v323
        %v325 = vmax.f32 %v324, -1.0
        %v326 = vmin.f32 %v325, 1.0
        %v327 = vmul.f32 %v326, %v326
        %v328 = vsub.f32 1.0, %v327
        %v329 = vmax.f32 %v328, 0.0
        %v330 = vrsqrt.pop %v329
        %v331 = vmul.f32 %v329, %v330
        %vm332 = vcmp.eq.f32.partialorder %v329, inf
        %v333 = vsel %vm332, %v329, %v331
        %vm334 = vcmp.eq.f32.partialorder %v329, 0.0
        %v335 = vand.u32 %v329, 2147483648
        %v336 = vsel %vm334, %v335, %v333
        %v337 = vmul.f32 %v322, %v326
        %v338 = vmul.f32 %v337, 1.442695
        %v339 = vpow.pop %v338
        %v340 = vmul.f32 %v326, 0.87758255
        %v341 = vmul.f32 %v336, 0.47942555
        %v342 = vsub.f32 %v340, %v341
        %v343 = vmul.f32 %v322, %v342
        %v344 = vmul.f32 %v343, 1.442695
        %v345 = vpow.pop %v344
        %p346 = scmp.eq.s32.totalorder %s29, 0
        // Predicated region
        $region41: #{tpu_custom_call.1} parent=31 // pred_check
          %p347 = pneg %p346
        $region42: #{tpu_custom_call.1} parent=31 // pred_check_branch
          %349 = sbr.rel (%p347) target = $region44
        $region43: #{tpu_custom_call.1} parent=31 // pred_region
          %vm350 = vcmask 7168
          %351 = vst.msk [vmem:[#allocation4] sm:$0xff] %vm350, 0.0
        $region44: #{tpu_custom_call.1} parent=31 // pred_fallthru
          _
        %v352 = vld [vmem:[#allocation4] sm:$0xff]
        %353 = vadd.xlane.f32.xlu0 %v339
        %v354 = vpop.xlane.xlu0 %353
        %v355 = vadd.f32 %v352, %v354
        %vm356 = vcmask 7168
        %357 = vst.msk [vmem:[#allocation4] sm:$0xff] %vm356, %v355
        %s358 = smul.u32 %s29, 8
        %s359 = scalar_lea.vmem [#allocation2], %s358
        %360 = vst [vmem:[%s359] sm:$0xff] %v345
        %s361 = scalar_lea.vmem [#allocation3], %s358
        %362 = vst [vmem:[%s361] sm:$0xff] %v339
        %p363 = scmp.eq.s32.totalorder %s29, 1
        // Predicated region
        $region45: #{tpu_custom_call.1} parent=31 // pred_check
          %p364 = pneg %p363
        $region46: #{tpu_custom_call.1} parent=31 // pred_check_branch
          %366 = sbr.rel (%p364) target = $region48
        $region47: #{tpu_custom_call.1} parent=31 // pred_region
          %v367 = vld [vmem:[#allocation4] sm:$0xff]
          %v368 = vld [vmem:[#allocation2] sm:$0xff]
          %v369 = vld [vmem:[#allocation3] sm:$0xff]
          %371 = vset.pattern.permute.xlu0 0
          %372 = vperm.xlu0 %371, %v367
          %v373 = vpop.permute.xlu0 %372
          %v375 = vsub.f32 %v373, %v369
          %v376 = vadd.f32 %v375, %v368
          %v377 = vrcp.pop %v376
          %v378 = vmul.f32 %v368, %v377
          %379 = vst [vmem:[%s237] sm:$0xff] %v378
          %s380 = scalar_lea.vmem [#allocation2], 8
          %v381 = vld [vmem:[%s380] sm:$0xff]
          %s382 = scalar_lea.vmem [#allocation3], 8
          %v383 = vld [vmem:[%s382] sm:$0xff]
          %v384 = vsub.f32 %v373, %v383
          %v385 = vadd.f32 %v384, %v381
          %v386 = vrcp.pop %v385
          %v387 = vmul.f32 %v381, %v386
          %388 = vst [vmem:[%s237 + $0x8] sm:$0xff] %v387
        $region48: #{tpu_custom_call.1} parent=31 // pred_fallthru
          _
        %s389 = sand.u32 %s117, 1
        %s390 = scalar_lea.sflag [#allocation8], %s389
        %s391 = sand.u32 %s117, 1
        %s392 = smul.addr %s391, 16
        %s393 = scalar_lea.vmem [#allocation11], %s392
        // Predicated region
        $region49: #{tpu_custom_call.1} parent=31 // pred_check
          %p394 = pneg %p127
        $region50: #{tpu_custom_call.1} parent=31 // pred_check_branch
          %396 = sbr.rel (%p394) target = $region52
        $region51: #{tpu_custom_call.1} parent=31 // pred_region
          %s398 = ssub.s32 256, 256
          %399 = vsyncadd %s390, %s398
          %s400 = smul.addr %s28, 2
          %s401 = smul.addr %s400, 128
          %s402 = scalar_lea.hbm %s3, %s401
          %s404 = sshll.u32 %s393, 4
          %s405 = int_to_ptr.vmem [resolvable:$true] %s404
          %407 = dma.vmem_to_hbm [thread:$0]  %s405, 256, %s402, %s390
        $region52: #{tpu_custom_call.1} parent=31 // pred_fallthru
          _
      $region32: #{tpu_custom_call.1} parent=5 // pred_fallthru
        _
      %p408 = scmp.le.s32.totalorder 2, %s19
      // Predicated region
      $region53: #{tpu_custom_call.1} parent=5 // pred_check
        %p409 = pneg %p408
      $region54: #{tpu_custom_call.1} parent=5 // pred_check_branch
        %411 = sbr.rel (%p409) target = $region56
      $region55: #{tpu_custom_call.1} parent=5 // pred_region
        %s412 = ssub.s32 %s19, 2
        // Predicated region
        $region57: #{tpu_custom_call.1} parent=55 // pred_check
          %p413 = pneg %p133
        $region58: #{tpu_custom_call.1} parent=55 // pred_check_branch
          %415 = sbr.rel (%p413) target = $region60
        $region59: #{tpu_custom_call.1} parent=55 // pred_region
          %s416 = sand.u32 %s118, 1
          %s417 = scalar_lea.sflag [#allocation8], %s416
          %s418 = sand.u32 %s118, 1
          %s419 = smul.addr %s418, 16
          %s420 = scalar_lea.vmem [#allocation11], %s419
          %421 = dma.done %s417, 256
        $region60: #{tpu_custom_call.1} parent=55 // pred_fallthru
          _
      $region56: #{tpu_custom_call.1} parent=5 // pred_fallthru
        _
    $region6: #{tpu_custom_call.1} parent=1 // loop_footer
      %s23 = sadd.s32 1, %s19
    $region7: #{tpu_custom_call.1} parent=1 // loop_footer_branch
      %18 = sbr.rel target = $region3
    $region8: #{tpu_custom_call.1} parent=1 // loop_exit
      _
    %422 = vsyncpa [#allocation7], 1
    %s423 = scalar_lea.sflag [#allocation7], 1
    %424 = vsyncpa %s423, 1
    %425 = vsyncpa [#allocation10], 1
    %s426 = scalar_lea.sflag [#allocation10], 1
    %427 = vsyncpa %s426, 1
    %428 = vsyncpa [#allocation8], 1
    %s429 = scalar_lea.sflag [#allocation8], 1
    %430 = vsyncpa %s429, 1

</llo_original>
